<compile_context>
chip_gen: v7x
topology: tpu7x:2x2x1
jax: 0.10.0
libtpu: 0.0.40
codegen_flags: <defaults>
</compile_context>

<pallas_src>
import jax
import jax.numpy as jnp
from jax.experimental import pallas as pl
from jax.experimental.pallas import tpu as pltpu


def channel_attention_kernel(x_ref, w1_ref, w2_ref, out_ref):
    # x: (Bblk, C, HW)   w1: (C, Cr)   w2: (Cr, C)
    bblk, c, hw = x_ref.shape
    inv_hw = 1.0 / hw

    # Adaptive avg / max pool over all spatial positions (cross-lane reduce).
    xf = x_ref[...].astype(jnp.float32)                  # (Bblk, C, HW)
    avg = jnp.sum(xf, axis=2) * inv_hw                   # (Bblk, C)
    mx = jnp.max(xf, axis=2)                             # (Bblk, C)

    # One fc1 matmul for both pooled vectors: LHS is (2*Bblk, C).
    pooled = jnp.concatenate([avg, mx], axis=0)          # (2*Bblk, C)

    w1 = w1_ref[...].astype(jnp.float32)                 # (C, Cr)
    w2 = w2_ref[...].astype(jnp.float32)                 # (Cr, C)

    h2 = jnp.maximum(
        jnp.dot(pooled, w1, preferred_element_type=jnp.float32), 0.0
    )                                                    # (2*Bblk, Cr)
    # fc2 is linear (no bias): fold the two fc2 applications into one matmul.
    h = h2[:bblk, :] + h2[bblk:, :]                      # (Bblk, Cr)
    logits = jnp.dot(h, w2, preferred_element_type=jnp.float32)   # (Bblk, C)

    attn = jax.nn.sigmoid(logits)                        # (Bblk, C), EUP

    # Re-read the block for the scale so it isn't held live across the fc
    # section (avoids block-sized vreg live ranges / spills).
    out_ref[...] = (
        x_ref[...].astype(jnp.float32) * attn[:, :, None]
    ).astype(out_ref.dtype)


def _pick_bblk(B, C, HW, itemsize, target_bytes=2 << 20):
    """Batch samples per grid step: ~target_bytes per input block, but keep the
    parallel grid length >= 2 when B >= 2 (both v7x TensorCores busy)."""
    per_sample = max(1, C * HW * itemsize)
    bblk = max(1, target_bytes // per_sample)
    if B >= 2:
        bblk = min(bblk, max(1, B // 2))
    return int(min(bblk, B))


def channel_attention_forward(x_nchw, params):
    """x_nchw: (B, C, H, W). Returns (B, C, H, W), same dtype as input."""
    B, C, H, W = x_nchw.shape
    HW = H * W

    # Free reshape of contiguous NCHW -- no HBM transpose passes.
    x = x_nchw.reshape(B, C, HW)                         # (B, C, HW)

    w1 = params["w1"]                                    # (C, Cr), pre-transposed
    w2 = params["w2"]                                    # (Cr, C), pre-transposed
    Cr = w1.shape[1]

    bblk = _pick_bblk(B, C, HW, x.dtype.itemsize)
    grid = (pl.cdiv(B, bblk),)

    out = pl.pallas_call(
        channel_attention_kernel,
        out_shape=jax.ShapeDtypeStruct((B, C, HW), x.dtype),
        grid=grid,
        in_specs=[
            pl.BlockSpec((bblk, C, HW), lambda b: (b, 0, 0)),  # activation block
            pl.BlockSpec((C, Cr), lambda b: (0, 0)),           # weights VMEM-resident
            pl.BlockSpec((Cr, C), lambda b: (0, 0)),
        ],
        out_specs=pl.BlockSpec((bblk, C, HW), lambda b: (b, 0, 0)),
        compiler_params=pltpu.CompilerParams(
            dimension_semantics=("parallel",),
        ),
    )(x, w1, w2)

    return out.reshape(B, C, H, W)                       # free reshape back


def make_params(key, in_planes, ratio=16):
    """PyTorch-shaped parameters of ChannelAttention(in_planes, ratio)."""
    k1, k2 = jax.random.split(key)
    cr = in_planes // ratio
    return {
        # Conv2d(in_planes, in_planes//ratio, 1, bias=False): (Cr, C, 1, 1)
        "fc1_weight": 0.1 * jax.random.normal(k1, (cr, in_planes, 1, 1), jnp.float32),
        # Conv2d(in_planes//ratio, in_planes, 1, bias=False): (C, Cr, 1, 1)
        "fc2_weight": 0.1 * jax.random.normal(k2, (in_planes, cr, 1, 1), jnp.float32),
    }


def prepare_params(torch_params):
    """One-time kernel-layout prep: 1x1 conv == matmul; pre-transpose weights."""
    cr, c = torch_params["fc1_weight"].shape[:2]
    w1 = torch_params["fc1_weight"].reshape(cr, c).T      # (C, Cr)
    w2 = torch_params["fc2_weight"].reshape(c, cr).T      # (Cr, C)
    return {"w1": w1, "w2": w2}


def channel_attention_reference(x, torch_params):
    """Pure-JAX reference of the PyTorch forward."""
    B, C, H, W = x.shape
    cr = torch_params["fc1_weight"].shape[0]
    w1 = torch_params["fc1_weight"].reshape(cr, C)        # (Cr, C)
    w2 = torch_params["fc2_weight"].reshape(C, cr)        # (C, Cr)
    avg = jnp.mean(x, axis=(2, 3))                        # (B, C)
    mx = jnp.max(x, axis=(2, 3))                          # (B, C)
    avg_out = jnp.maximum(avg @ w1.T, 0.0) @ w2.T
    max_out = jnp.maximum(mx @ w1.T, 0.0) @ w2.T
    attn = jax.nn.sigmoid(avg_out + max_out)              # (B, C)
    return x * attn[:, :, None, None]


if __name__ == "__main__":
    key = jax.random.PRNGKey(0)
    kx, kp = jax.random.split(key)

    B, C, H, W = 2, 128, 16, 16        # ratio=16 -> Cr=8; HW=256 (lane-dense)
    ratio = 16

    x = jax.random.normal(kx, (B, C, H, W), jnp.float32)
    torch_params = make_params(kp, C, ratio)
    params = prepare_params(torch_params)

    out = channel_attention_forward(x, params)
    out = jax.block_until_ready(out)

    ref = channel_attention_reference(x, torch_params)
    assert out.shape == (B, C, H, W)
    assert jnp.allclose(out, ref, atol=1e-4, rtol=1e-4), "mismatch vs reference"

    print("KERNEL_OK")
</pallas_src>

<mosaic_0001>
module attributes {stable_mosaic.version = 11 : i64} {
  func.func @channel_attention_kernel(%arg0: i32, %arg1: memref<1x128x256xf32, #tpu.memory_space<vmem>>, %arg2: memref<128x8xf32, #tpu.memory_space<vmem>>, %arg3: memref<8x128xf32, #tpu.memory_space<vmem>>, %arg4: memref<1x128x256xf32, #tpu.memory_space<vmem>>) attributes {dimension_semantics = [#tpu.dimension_semantics<parallel>], iteration_bounds = array<i64: 2>, scalar_prefetch = 0 : i64, scratch_operands = 0 : i64, tpu.core_type = #tpu.core_type<tc>, window_params = [{transform_indices = @transform_0, window_bounds = array<i64: 1, 128, 256>}, {pipeline_mode = #tpu.pipeline_mode<synchronous>, transform_indices = @transform_1, window_bounds = array<i64: 128, 8>}, {pipeline_mode = #tpu.pipeline_mode<synchronous>, transform_indices = @transform_2, window_bounds = array<i64: 8, 128>}, {transform_indices = @transform_3, window_bounds = array<i64: 1, 128, 256>}]} {
    %c0 = arith.constant 0 : index
    %c0_0 = arith.constant 0 : index
    %c0_1 = arith.constant 0 : index
    %0 = vector.load %arg1[%c0, %c0_0, %c0_1] : memref<1x128x256xf32, #tpu.memory_space<vmem>>, vector<1x128x256xf32>
    %cst = arith.constant dense<0.000000e+00> : vector<1x128xf32>
    %1 = vector.multi_reduction <add>, %0, %cst [2] : vector<1x128x256xf32> to vector<1x128xf32>
    %cst_2 = arith.constant 3.906250e-03 : f32
    %2 = vector.broadcast %cst_2 : f32 to vector<1x128xf32>
    %3 = arith.mulf %1, %2 : vector<1x128xf32>
    %cst_3 = arith.constant dense<0xFF800000> : vector<1x128xf32>
    %4 = vector.multi_reduction <maximumf>, %0, %cst_3 [2] : vector<1x128x256xf32> to vector<1x128xf32>
    %5 = tpu.concatenate %3, %4 in 0 : vector<1x128xf32>, vector<1x128xf32> -> vector<2x128xf32>
    %c0_4 = arith.constant 0 : index
    %c0_5 = arith.constant 0 : index
    %6 = vector.load %arg2[%c0_4, %c0_5] : memref<128x8xf32, #tpu.memory_space<vmem>>, vector<128x8xf32>
    %c0_6 = arith.constant 0 : index
    %c0_7 = arith.constant 0 : index
    %7 = vector.load %arg3[%c0_6, %c0_7] : memref<8x128xf32, #tpu.memory_space<vmem>>, vector<8x128xf32>
    %cst_8 = arith.constant dense<0.000000e+00> : vector<2x8xf32>
    %8 = tpu.matmul %5, %6, %cst_8 {dimension_numbers = #tpu.dot_dimension_numbers<[1], [0], [0], [1], [0, 0, 1, 1], [], []>} : vector<2x128xf32>, vector<128x8xf32>, vector<2x8xf32> -> vector<2x8xf32>
    %cst_9 = arith.constant 0.000000e+00 : f32
    %9 = vector.broadcast %cst_9 : f32 to vector<2x8xf32>
    %10 = arith.maximumf %8, %9 : vector<2x8xf32>
    %11 = vector.extract_strided_slice %10 {offsets = [0, 0], sizes = [1, 8], strides = [1, 1]} : vector<2x8xf32> to vector<1x8xf32>
    %12 = vector.extract_strided_slice %10 {offsets = [1, 0], sizes = [1, 8], strides = [1, 1]} : vector<2x8xf32> to vector<1x8xf32>
    %13 = arith.addf %11, %12 : vector<1x8xf32>
    %cst_10 = arith.constant dense<0.000000e+00> : vector<1x128xf32>
    %14 = tpu.matmul %13, %7, %cst_10 {dimension_numbers = #tpu.dot_dimension_numbers<[1], [0], [0], [1], [0, 0, 1, 1], [], []>} : vector<1x8xf32>, vector<8x128xf32>, vector<1x128xf32> -> vector<1x128xf32>
    %15 = arith.negf %14 : vector<1x128xf32>
    %16 = math.exp %15 : vector<1x128xf32>
    %cst_11 = arith.constant 1.000000e+00 : f32
    %17 = vector.broadcast %cst_11 : f32 to vector<1x128xf32>
    %18 = arith.addf %17, %16 : vector<1x128xf32>
    %19 = arith.divf %17, %18 : vector<1x128xf32>
    %c0_12 = arith.constant 0 : index
    %c0_13 = arith.constant 0 : index
    %c0_14 = arith.constant 0 : index
    %20 = vector.load %arg1[%c0_12, %c0_13, %c0_14] : memref<1x128x256xf32, #tpu.memory_space<vmem>>, vector<1x128x256xf32>
    %21 = vector.shape_cast %19 : vector<1x128xf32> to vector<1x128x1xf32>
    %22 = vector.broadcast %21 : vector<1x128x1xf32> to vector<1x128x256xf32>
    %23 = arith.mulf %20, %22 : vector<1x128x256xf32>
    %c0_15 = arith.constant 0 : index
    %c0_16 = arith.constant 0 : index
    %c0_17 = arith.constant 0 : index
    %24 = vector.load %arg4[%c0_15, %c0_16, %c0_17] : memref<1x128x256xf32, #tpu.memory_space<vmem>>, vector<1x128x256xf32>
    tpu.vector_store %arg4[%c0_15, %c0_16, %c0_17], %23 {strides = array<i32>} : memref<1x128x256xf32, #tpu.memory_space<vmem>>, vector<1x128x256xf32>,
    return
  }
  func.func @transform_0(%arg0: i32) -> (i32, i32, i32) {
    %c0_i32 = arith.constant 0 : i32
    %c0_i32_0 = arith.constant 0 : i32
    %c0_i32_1 = arith.constant 0 : i32
    return %arg0, %c0_i32, %c0_i32_0 : i32, i32, i32
  }
  func.func @transform_1(%arg0: i32) -> (i32, i32) {
    %c0_i32 = arith.constant 0 : i32
    %c0_i32_0 = arith.constant 0 : i32
    %c0_i32_1 = arith.constant 0 : i32
    return %c0_i32, %c0_i32_0 : i32, i32
  }
  func.func @transform_2(%arg0: i32) -> (i32, i32) {
    %c0_i32 = arith.constant 0 : i32
    %c0_i32_0 = arith.constant 0 : i32
    %c0_i32_1 = arith.constant 0 : i32
    return %c0_i32, %c0_i32_0 : i32, i32
  }
  func.func @transform_3(%arg0: i32) -> (i32, i32, i32) {
    %c0_i32 = arith.constant 0 : i32
    %c0_i32_0 = arith.constant 0 : i32
    %c0_i32_1 = arith.constant 0 : i32
    return %arg0, %c0_i32, %c0_i32_0 : i32, i32, i32
  }
}

</mosaic_0001>

<llo_original>
// kernel: tpu_custom_call.1
$region0: #{tpu_custom_call.1}
  #allocation0 [shape = 'u32[]', space=smem, size = 0x4, offset = 0x4, fixed_abs, tag = 'smem constant byte address 0x4 - core index']
  #allocation1 [shape = 'u32[144,128]{1,0:T(1,128)}', space=vmem, size = 0x12000, scoped, tag = 'internal scratch']
  %s0 = inlined_call_operand.hbm [shape: f32[2,128,256], index: 0, kind: input, shape index: {}]
  %s1 = inlined_call_operand.vmem [shape: f32[128,8], index: 1, kind: input, shape index: {}]
  %s2 = inlined_call_operand.vmem [shape: f32[8,128], index: 2, kind: input, shape index: {}]
  %s3 = inlined_call_operand.hbm [shape: f32[2,128,256], index: 3, kind: output, shape index: {}]
  %s4 = sld [smem:[#allocation0]]
  $region49: #{tpu_custom_call.1} parent=0
    _
  %s6 = ssub.s32 1, %s4
  %s7 = scalar_select 0, %s6, %s4
  $region1: #{tpu_custom_call.1} parent=0
    #allocation2 [shape = 'u8[262144]{0}', space=vmem, size = 0x40000, scoped, tag = 'input window, operand 0']
    #allocation3 [shape = 's32[2]{0}', space=sflag, size = 0x8, scoped, tag = 'scoped memory for tpu_custom_call.1']
    #allocation4 [shape = 's32[2]{0}', space=sflag, size = 0x8, scoped, tag = 'scoped memory for tpu_custom_call.1']
    #allocation5 [shape = 'u8[262144]{0}', space=vmem, size = 0x40000, scoped, tag = 'output window, operand 0']
    %8 = vsyncpa [#allocation3], 0
    %s9 = scalar_lea.sflag [#allocation3], 1
    %10 = vsyncpa %s9, 0
    %11 = vsyncpa [#allocation4], 0
    %s12 = scalar_lea.sflag [#allocation4], 1
    %13 = vsyncpa %s12, 0
    loop: start=0, step=1, limit=4
    $region2: #{tpu_custom_call.1} parent=1 // loop_pre_header
      _
    $region3: #{tpu_custom_call.1} parent=1 // loop_header
      %s15 = sphi 0, %s19
      %p16 = scmp.ge.s32.totalorder %s15, 4
      %s25 = sphi 0, %s27
      %s28 = sphi 0, %s25
      %s29 = sphi 0, %s28
      %s45 = sphi 0, %s29
      %s49 = sphi 0, %s49
      %s51 = sphi 0, %s49
      %s52 = sphi 0, %s51
      %s66 = sphi 0, %s52
      %s70 = sphi 0, %s70
      %s72 = sphi 0, %s70
      %s73 = sphi 0, %s72
      %s87 = sphi 0, %s73
      %s93 = sphi 0, %s95
      %s96 = sphi 0, %s93
      %s97 = sphi 0, %s96
      %s113 = sphi 0, %s97
    $region4: #{tpu_custom_call.1} parent=1 // loop_header_branch
      %18 = sbr.rel (%p16) target = $region8
    $region5: #{tpu_custom_call.1} parent=1 // loop_body
      %s20 = ssub.s32 %s15, 1
      %s21 = ssub.s32 %s15, 2
      %s22 = sadd.s32 %s15, 1
      %s23 = ssub.s32 %s15, %s22
      %p24 = scmp.eq.s32.totalorder %s23, 0
      %s26 = sadd.s32 %s25, 1
      %s27 = scalar_select %p24, %s25, %s26
      %p30 = pneg %p24
      %p31 = scmp.eq.s32.totalorder %s15, 1
      %p32 = por %p30, %p31
      %p33 = scmp.ne.s32.totalorder %s25, %s28
      %p34 = scmp.eq.s32.totalorder %s15, 0
      %p35 = por %p33, %p34
      %p36 = scmp.ne.s32.totalorder %s25, %s28
      %p37 = scmp.eq.s32.totalorder %s20, 1
      %p38 = por %p36, %p37
      %p39 = scmp.ne.s32.totalorder %s28, %s29
      %p40 = scmp.eq.s32.totalorder %s20, 0
      %p41 = por %p39, %p40
      %p42 = scmp.ne.s32.totalorder %s28, %s29
      %p43 = scmp.eq.s32.totalorder %s21, 1
      %p44 = por %p42, %p43
      %p46 = scmp.ne.s32.totalorder %s29, %s45
      %p47 = scmp.eq.s32.totalorder %s21, 0
      %p48 = por %p46, %p47
      %s50 = sadd.s32 %s49, 1
      %p53 = scmp.eq.s32.totalorder %s15, 1
      %p54 = scmp.ne.s32.totalorder %s49, %s51
      %p55 = scmp.eq.s32.totalorder %s15, 0
      %p56 = por %p54, %p55
      %p57 = scmp.ne.s32.totalorder %s49, %s51
      %p58 = scmp.eq.s32.totalorder %s20, 1
      %p59 = por %p57, %p58
      %p60 = scmp.ne.s32.totalorder %s51, %s52
      %p61 = scmp.eq.s32.totalorder %s20, 0
      %p62 = por %p60, %p61
      %p63 = scmp.ne.s32.totalorder %s51, %s52
      %p64 = scmp.eq.s32.totalorder %s21, 1
      %p65 = por %p63, %p64
      %p67 = scmp.ne.s32.totalorder %s52, %s66
      %p68 = scmp.eq.s32.totalorder %s21, 0
      %p69 = por %p67, %p68
      %s71 = sadd.s32 %s70, 1
      %p74 = scmp.eq.s32.totalorder %s15, 1
      %p75 = scmp.ne.s32.totalorder %s70, %s72
      %p76 = scmp.eq.s32.totalorder %s15, 0
      %p77 = por %p75, %p76
      %p78 = scmp.ne.s32.totalorder %s70, %s72
      %p79 = scmp.eq.s32.totalorder %s20, 1
      %p80 = por %p78, %p79
      %p81 = scmp.ne.s32.totalorder %s72, %s73
      %p82 = scmp.eq.s32.totalorder %s20, 0
      %p83 = por %p81, %p82
      %p84 = scmp.ne.s32.totalorder %s72, %s73
      %p85 = scmp.eq.s32.totalorder %s21, 1
      %p86 = por %p84, %p85
      %p88 = scmp.ne.s32.totalorder %s73, %s87
      %p89 = scmp.eq.s32.totalorder %s21, 0
      %p90 = por %p88, %p89
      %s91 = ssub.s32 %s15, %s22
      %p92 = scmp.eq.s32.totalorder %s91, 0
      %s94 = sadd.s32 %s93, 1
      %s95 = scalar_select %p92, %s93, %s94
      %p98 = pneg %p92
      %p99 = scmp.eq.s32.totalorder %s15, 1
      %p100 = por %p98, %p99
      %p101 = scmp.ne.s32.totalorder %s93, %s96
      %p102 = scmp.eq.s32.totalorder %s15, 0
      %p103 = por %p101, %p102
      %p104 = scmp.ne.s32.totalorder %s93, %s96
      %p105 = scmp.eq.s32.totalorder %s20, 1
      %p106 = por %p104, %p105
      %p107 = scmp.ne.s32.totalorder %s96, %s97
      %p108 = scmp.eq.s32.totalorder %s20, 0
      %p109 = por %p107, %p108
      %p110 = scmp.ne.s32.totalorder %s96, %s97
      %p111 = scmp.eq.s32.totalorder %s21, 1
      %p112 = por %p110, %p111
      %p114 = scmp.ne.s32.totalorder %s97, %s113
      %p115 = scmp.eq.s32.totalorder %s21, 0
      %p116 = por %p114, %p115
      %p117 = scmp.le.s32.totalorder 1, %s15
      %p118 = scmp.lt.s32.totalorder %s15, 3
      %p119 = pnand %p117, %p118
      %p120 = pneg %p119
      // Predicated region
      $region9: #{tpu_custom_call.1} parent=5 // pred_check
        _
      $region10: #{tpu_custom_call.1} parent=5 // pred_check_branch
        %122 = sbr.rel (%p119) target = $region12
      $region11: #{tpu_custom_call.1} parent=5 // pred_region
        %s123 = ssub.s32 %s15, 1
        // Predicated region
        $region13: #{tpu_custom_call.1} parent=11 // pred_check
          %p124 = pneg %p62
        $region14: #{tpu_custom_call.1} parent=11 // pred_check_branch
          %126 = sbr.rel (%p124) target = $region16
        $region15: #{tpu_custom_call.1} parent=11 // pred_region
          _
        $region16: #{tpu_custom_call.1} parent=11 // pred_fallthru
          _
        // Predicated region
        $region17: #{tpu_custom_call.1} parent=11 // pred_check
          %p127 = pneg %p83
        $region18: #{tpu_custom_call.1} parent=11 // pred_check_branch
          %129 = sbr.rel (%p127) target = $region20
        $region19: #{tpu_custom_call.1} parent=11 // pred_region
          _
        $region20: #{tpu_custom_call.1} parent=11 // pred_fallthru
          _
      $region12: #{tpu_custom_call.1} parent=5 // pred_fallthru
        _
      %p130 = scmp.lt.s32.totalorder %s15, 2
      // Predicated region
      $region21: #{tpu_custom_call.1} parent=5 // pred_check
        %p131 = pneg %p130
      $region22: #{tpu_custom_call.1} parent=5 // pred_check_branch
        %133 = sbr.rel (%p131) target = $region24
      $region23: #{tpu_custom_call.1} parent=5 // pred_region
        // Predicated region
        $region25: #{tpu_custom_call.1} parent=23 // pred_check
          %p134 = pneg %p35
        $region26: #{tpu_custom_call.1} parent=23 // pred_check_branch
          %136 = sbr.rel (%p134) target = $region28
        $region27: #{tpu_custom_call.1} parent=23 // pred_region
          %s137 = sand.u32 %s25, 1
          %s138 = scalar_lea.sflag [#allocation3], %s137
          %s139 = sand.u32 %s25, 1
          %s140 = smul.addr %s139, 256
          %s141 = scalar_lea.vmem [#allocation2], %s140
          %s143 = ssub.s32 4096, 4096
          %144 = vsyncadd %s138, %s143
          %s145 = smul.addr %s15, 32
          %s146 = smul.addr %s145, 128
          %s147 = scalar_lea.hbm %s0, %s146
          %s148 = sshll.u32 %s141, 4
          %s149 = int_to_ptr.vmem [resolvable:$true] %s148
          %154 = dma.hbm_to_vmem [thread:$0]  %s147, 4096, %s149, %s138, 256, 256, 16
        $region28: #{tpu_custom_call.1} parent=23 // pred_fallthru
          _
      $region24: #{tpu_custom_call.1} parent=5 // pred_fallthru
        _
      %p155 = scmp.le.s32.totalorder 1, %s15
      %p156 = scmp.lt.s32.totalorder %s15, 3
      %p157 = pnand %p155, %p156
      %p158 = pneg %p157
      // Predicated region
      $region29: #{tpu_custom_call.1} parent=5 // pred_check
        _
      $region30: #{tpu_custom_call.1} parent=5 // pred_check_branch
        %160 = sbr.rel (%p157) target = $region32
      $region31: #{tpu_custom_call.1} parent=5 // pred_region
        %s161 = ssub.s32 %s15, 1
        %s162 = sand.u32 %s28, 1
        %s163 = scalar_lea.sflag [#allocation3], %s162
        %s164 = sand.u32 %s28, 1
        %s165 = smul.addr %s164, 256
        %s166 = scalar_lea.vmem [#allocation2], %s165
        // Predicated region
        $region33: #{tpu_custom_call.1} parent=31 // pred_check
          %p167 = pneg %p41
        $region34: #{tpu_custom_call.1} parent=31 // pred_check_branch
          %169 = sbr.rel (%p167) target = $region36
        $region35: #{tpu_custom_call.1} parent=31 // pred_region
          %170 = dma.done %s163, 4096
        $region36: #{tpu_custom_call.1} parent=31 // pred_fallthru
          _
        %s171 = sand.u32 %s28, 1
        %s172 = scalar_lea.sflag [#allocation3], %s171
        %s173 = sand.u32 %s28, 1
        %s174 = smul.addr %s173, 256
        %s175 = scalar_lea.vmem [#allocation2], %s174
        %p176 = pneg %p41
        %p177 = pneg %p38
        %p178 = pneg %p62
        %p179 = pneg %p59
        %p180 = pneg %p83
        %p181 = pneg %p80
        %p182 = pneg %p109
        %p183 = pneg %p106
        %s184 = sand.u32 %s96, 1
        %s185 = scalar_lea.sflag [#allocation4], %s184
        %s186 = sand.u32 %s96, 1
        %s187 = smul.addr %s186, 256
        %s188 = scalar_lea.vmem [#allocation5], %s187
        %v189 = vld [vmem:[%s166] sm:$0xff]
        %v190 = vld [vmem:[%s166 + $0x8] sm:$0xff]
        %v191 = vld [vmem:[%s166 + $0x10] sm:$0xff]
        %v192 = vld [vmem:[%s166 + $0x18] sm:$0xff]
        %v193 = vld [vmem:[%s166 + $0x20] sm:$0xff]
        %v194 = vld [vmem:[%s166 + $0x28] sm:$0xff]
        %v195 = vld [vmem:[%s166 + $0x30] sm:$0xff]
        %v196 = vld [vmem:[%s166 + $0x38] sm:$0xff]
        %v197 = vld [vmem:[%s166 + $0x40] sm:$0xff]
        %v198 = vld [vmem:[%s166 + $0x48] sm:$0xff]
        %v199 = vld [vmem:[%s166 + $0x50] sm:$0xff]
        %v200 = vld [vmem:[%s166 + $0x58] sm:$0xff]
        %v201 = vld [vmem:[%s166 + $0x60] sm:$0xff]
        %v202 = vld [vmem:[%s166 + $0x68] sm:$0xff]
        %v203 = vld [vmem:[%s166 + $0x70] sm:$0xff]
        %v204 = vld [vmem:[%s166 + $0x78] sm:$0xff]
        %v205 = vld [vmem:[%s166 + $0x80] sm:$0xff]
        %v206 = vld [vmem:[%s166 + $0x88] sm:$0xff]
        %v207 = vld [vmem:[%s166 + $0x90] sm:$0xff]
        %v208 = vld [vmem:[%s166 + $0x98] sm:$0xff]
        %v209 = vld [vmem:[%s166 + $0xa0] sm:$0xff]
        %v210 = vld [vmem:[%s166 + $0xa8] sm:$0xff]
        %v211 = vld [vmem:[%s166 + $0xb0] sm:$0xff]
        %v212 = vld [vmem:[%s166 + $0xb8] sm:$0xff]
        %v213 = vld [vmem:[%s166 + $0xc0] sm:$0xff]
        %v214 = vld [vmem:[%s166 + $0xc8] sm:$0xff]
        %v215 = vld [vmem:[%s166 + $0xd0] sm:$0xff]
        %v216 = vld [vmem:[%s166 + $0xd8] sm:$0xff]
        %v217 = vld [vmem:[%s166 + $0xe0] sm:$0xff]
        %v218 = vld [vmem:[%s166 + $0xe8] sm:$0xff]
        %v219 = vld [vmem:[%s166 + $0xf0] sm:$0xff]
        %v220 = vld [vmem:[%s166 + $0xf8] sm:$0xff]
        %v221 = vadd.f32 %v189, %v190
        %222 = vadd.xlane.f32.xlu0 %v221
        %v223 = vpop.xlane.xlu0 %222
        %v224 = vadd.f32 %v191, %v192
        %225 = vadd.xlane.f32.xlu0 %v224
        %v226 = vpop.xlane.xlu0 %225
        %v227 = vadd.f32 %v193, %v194
        %228 = vadd.xlane.f32.xlu0 %v227
        %v229 = vpop.xlane.xlu0 %228
        %v230 = vadd.f32 %v195, %v196
        %231 = vadd.xlane.f32.xlu0 %v230
        %v232 = vpop.xlane.xlu0 %231
        %v233 = vadd.f32 %v197, %v198
        %234 = vadd.xlane.f32.xlu0 %v233
        %v235 = vpop.xlane.xlu0 %234
        %v236 = vadd.f32 %v199, %v200
        %237 = vadd.xlane.f32.xlu0 %v236
        %v238 = vpop.xlane.xlu0 %237
        %v239 = vadd.f32 %v201, %v202
        %240 = vadd.xlane.f32.xlu0 %v239
        %v241 = vpop.xlane.xlu0 %240
        %v242 = vadd.f32 %v203, %v204
        %243 = vadd.xlane.f32.xlu0 %v242
        %v244 = vpop.xlane.xlu0 %243
        %v245 = vadd.f32 %v205, %v206
        %246 = vadd.xlane.f32.xlu0 %v245
        %v247 = vpop.xlane.xlu0 %246
        %v248 = vadd.f32 %v207, %v208
        %249 = vadd.xlane.f32.xlu0 %v248
        %v250 = vpop.xlane.xlu0 %249
        %v251 = vadd.f32 %v209, %v210
        %252 = vadd.xlane.f32.xlu0 %v251
        %v253 = vpop.xlane.xlu0 %252
        %v254 = vadd.f32 %v211, %v212
        %255 = vadd.xlane.f32.xlu0 %v254
        %v256 = vpop.xlane.xlu0 %255
        %v257 = vadd.f32 %v213, %v214
        %258 = vadd.xlane.f32.xlu0 %v257
        %v259 = vpop.xlane.xlu0 %258
        %v260 = vadd.f32 %v215, %v216
        %261 = vadd.xlane.f32.xlu0 %v260
        %v262 = vpop.xlane.xlu0 %261
        %v263 = vadd.f32 %v217, %v218
        %264 = vadd.xlane.f32.xlu0 %v263
        %v265 = vpop.xlane.xlu0 %264
        %v266 = vadd.f32 %v219, %v220
        %267 = vadd.xlane.f32.xlu0 %v266
        %v268 = vpop.xlane.xlu0 %267
        %v269 = vmul.f32 %v223, 0.00390625
        %v270 = vmul.f32 %v226, 0.00390625
        %v271 = vmul.f32 %v229, 0.00390625
        %v272 = vmul.f32 %v232, 0.00390625
        %v273 = vmul.f32 %v235, 0.00390625
        %v274 = vmul.f32 %v238, 0.00390625
        %v275 = vmul.f32 %v241, 0.00390625
        %v276 = vmul.f32 %v244, 0.00390625
        %v277 = vmul.f32 %v247, 0.00390625
        %v278 = vmul.f32 %v250, 0.00390625
        %v279 = vmul.f32 %v253, 0.00390625
        %v280 = vmul.f32 %v256, 0.00390625
        %v281 = vmul.f32 %v259, 0.00390625
        %v282 = vmul.f32 %v262, 0.00390625
        %v283 = vmul.f32 %v265, 0.00390625
        %v284 = vmul.f32 %v268, 0.00390625
        %v285 = vmax.f32 %v189, %v190
        %286 = vmax.xlane.f32.xlu0 %v285
        %v287 = vpop.xlane.xlu0 %286
        %v288 = vmax.f32 %v191, %v192
        %289 = vmax.xlane.f32.xlu0 %v288
        %v290 = vpop.xlane.xlu0 %289
        %v291 = vmax.f32 %v193, %v194
        %292 = vmax.xlane.f32.xlu0 %v291
        %v293 = vpop.xlane.xlu0 %292
        %v294 = vmax.f32 %v195, %v196
        %295 = vmax.xlane.f32.xlu0 %v294
        %v296 = vpop.xlane.xlu0 %295
        %v297 = vmax.f32 %v197, %v198
        %298 = vmax.xlane.f32.xlu0 %v297
        %v299 = vpop.xlane.xlu0 %298
        %v300 = vmax.f32 %v199, %v200
        %301 = vmax.xlane.f32.xlu0 %v300
        %v302 = vpop.xlane.xlu0 %301
        %v303 = vmax.f32 %v201, %v202
        %304 = vmax.xlane.f32.xlu0 %v303
        %v305 = vpop.xlane.xlu0 %304
        %v306 = vmax.f32 %v203, %v204
        %307 = vmax.xlane.f32.xlu0 %v306
        %v308 = vpop.xlane.xlu0 %307
        %v309 = vmax.f32 %v205, %v206
        %310 = vmax.xlane.f32.xlu0 %v309
        %v311 = vpop.xlane.xlu0 %310
        %v312 = vmax.f32 %v207, %v208
        %313 = vmax.xlane.f32.xlu0 %v312
        %v314 = vpop.xlane.xlu0 %313
        %v315 = vmax.f32 %v209, %v210
        %316 = vmax.xlane.f32.xlu0 %v315
        %v317 = vpop.xlane.xlu0 %316
        %v318 = vmax.f32 %v211, %v212
        %319 = vmax.xlane.f32.xlu0 %v318
        %v320 = vpop.xlane.xlu0 %319
        %v321 = vmax.f32 %v213, %v214
        %322 = vmax.xlane.f32.xlu0 %v321
        %v323 = vpop.xlane.xlu0 %322
        %v324 = vmax.f32 %v215, %v216
        %325 = vmax.xlane.f32.xlu0 %v324
        %v326 = vpop.xlane.xlu0 %325
        %v327 = vmax.f32 %v217, %v218
        %328 = vmax.xlane.f32.xlu0 %v327
        %v329 = vpop.xlane.xlu0 %328
        %v330 = vmax.f32 %v219, %v220
        %331 = vmax.xlane.f32.xlu0 %v330
        %v332 = vpop.xlane.xlu0 %331
        %v349 = vlaneseq
        %v350 = vand.u32 %v349, 127
        %v351 = vlaneseq
        %v352 = vshrl.u32 %v351, 7
        %v353 = vsub.s32 %v350, %v352
        %v354 = vrot.slane %v269, %v353
        %v355 = vadd.s32 %v350, 4294967288
        %v356 = vlaneseq
        %v357 = vshrl.u32 %v356, 7
        %v358 = vsub.s32 %v355, %v357
        %v359 = vrot.slane %v270, %v358
        %vm360 = vcmask 130112
        %v361 = vsel %vm360, %v359, %v354
        %v362 = vadd.s32 %v350, 4294967280
        %v363 = vlaneseq
        %v364 = vshrl.u32 %v363, 7
        %v365 = vsub.s32 %v362, %v364
        %v366 = vrot.slane %v271, %v365
        %vm367 = vcmask 195712
        %v368 = vsel %vm367, %v366, %v361
        %v369 = vadd.s32 %v350, 4294967272
        %v370 = vlaneseq
        %v371 = vshrl.u32 %v370, 7
        %v372 = vsub.s32 %v369, %v371
        %v373 = vrot.slane %v272, %v372
        %vm374 = vcmask 261312
        %v375 = vsel %vm374, %v373, %v368
        %v376 = vadd.s32 %v350, 4294967264
        %v377 = vlaneseq
        %v378 = vshrl.u32 %v377, 7
        %v379 = vsub.s32 %v376, %v378
        %v380 = vrot.slane %v273, %v379
        %vm381 = vcmask 326912
        %v382 = vsel %vm381, %v380, %v375
        %v383 = vadd.s32 %v350, 4294967256
        %v384 = vlaneseq
        %v385 = vshrl.u32 %v384, 7
        %v386 = vsub.s32 %v383, %v385
        %v387 = vrot.slane %v274, %v386
        %vm388 = vcmask 392512
        %v389 = vsel %vm388, %v387, %v382
        %v390 = vadd.s32 %v350, 4294967248
        %v391 = vlaneseq
        %v392 = vshrl.u32 %v391, 7
        %v393 = vsub.s32 %v390, %v392
        %v394 = vrot.slane %v275, %v393
        %vm395 = vcmask 458112
        %v396 = vsel %vm395, %v394, %v389
        %v397 = vadd.s32 %v350, 4294967240
        %v398 = vlaneseq
        %v399 = vshrl.u32 %v398, 7
        %v400 = vsub.s32 %v397, %v399
        %v401 = vrot.slane %v276, %v400
        %vm402 = vcmask 523712
        %v403 = vsel %vm402, %v401, %v396
        %v404 = vadd.s32 %v350, 4294967232
        %v405 = vlaneseq
        %v406 = vshrl.u32 %v405, 7
        %v407 = vsub.s32 %v404, %v406
        %v408 = vrot.slane %v277, %v407
        %vm409 = vcmask 589312
        %v410 = vsel %vm409, %v408, %v403
        %v411 = vadd.s32 %v350, 4294967224
        %v412 = vlaneseq
        %v413 = vshrl.u32 %v412, 7
        %v414 = vsub.s32 %v411, %v413
        %v415 = vrot.slane %v278, %v414
        %vm416 = vcmask 654912
        %v417 = vsel %vm416, %v415, %v410
        %v418 = vadd.s32 %v350, 4294967216
        %v419 = vlaneseq
        %v420 = vshrl.u32 %v419, 7
        %v421 = vsub.s32 %v418, %v420
        %v422 = vrot.slane %v279, %v421
        %vm423 = vcmask 720512
        %v424 = vsel %vm423, %v422, %v417
        %v425 = vadd.s32 %v350, 4294967208
        %v426 = vlaneseq
        %v427 = vshrl.u32 %v426, 7
        %v428 = vsub.s32 %v425, %v427
        %v429 = vrot.slane %v280, %v428
        %vm430 = vcmask 786112
        %v431 = vsel %vm430, %v429, %v424
        %v432 = vadd.s32 %v350, 4294967200
        %v433 = vlaneseq
        %v434 = vshrl.u32 %v433, 7
        %v435 = vsub.s32 %v432, %v434
        %v436 = vrot.slane %v281, %v435
        %vm437 = vcmask 851712
        %v438 = vsel %vm437, %v436, %v431
        %v439 = vadd.s32 %v350, 4294967192
        %v440 = vlaneseq
        %v441 = vshrl.u32 %v440, 7
        %v442 = vsub.s32 %v439, %v441
        %v443 = vrot.slane %v282, %v442
        %vm444 = vcmask 917312
        %v445 = vsel %vm444, %v443, %v438
        %v446 = vadd.s32 %v350, 4294967184
        %v447 = vlaneseq
        %v448 = vshrl.u32 %v447, 7
        %v449 = vsub.s32 %v446, %v448
        %v450 = vrot.slane %v283, %v449
        %vm451 = vcmask 982912
        %v452 = vsel %vm451, %v450, %v445
        %v453 = vadd.s32 %v350, 4294967176
        %v454 = vlaneseq
        %v455 = vshrl.u32 %v454, 7
        %v456 = vsub.s32 %v453, %v455
        %v457 = vrot.slane %v284, %v456
        %vm458 = vcmask 1048512
        %v459 = vsel %vm458, %v457, %v452
        %v477 = vlaneseq
        %v478 = vshrl.u32 %v477, 7
        %v479 = vsub.s32 %v350, %v478
        %v480 = vrot.slane %v287, %v479
        %v481 = vlaneseq
        %v482 = vshrl.u32 %v481, 7
        %v483 = vsub.s32 %v355, %v482
        %v484 = vrot.slane %v290, %v483
        %v485 = vsel %vm360, %v484, %v480
        %v486 = vlaneseq
        %v487 = vshrl.u32 %v486, 7
        %v488 = vsub.s32 %v362, %v487
        %v489 = vrot.slane %v293, %v488
        %v490 = vsel %vm367, %v489, %v485
        %v491 = vlaneseq
        %v492 = vshrl.u32 %v491, 7
        %v493 = vsub.s32 %v369, %v492
        %v494 = vrot.slane %v296, %v493
        %v495 = vsel %vm374, %v494, %v490
        %v496 = vlaneseq
        %v497 = vshrl.u32 %v496, 7
        %v498 = vsub.s32 %v376, %v497
        %v499 = vrot.slane %v299, %v498
        %v500 = vsel %vm381, %v499, %v495
        %v501 = vlaneseq
        %v502 = vshrl.u32 %v501, 7
        %v503 = vsub.s32 %v383, %v502
        %v504 = vrot.slane %v302, %v503
        %v505 = vsel %vm388, %v504, %v500
        %v506 = vlaneseq
        %v507 = vshrl.u32 %v506, 7
        %v508 = vsub.s32 %v390, %v507
        %v509 = vrot.slane %v305, %v508
        %v510 = vsel %vm395, %v509, %v505
        %v511 = vlaneseq
        %v512 = vshrl.u32 %v511, 7
        %v513 = vsub.s32 %v397, %v512
        %v514 = vrot.slane %v308, %v513
        %v515 = vsel %vm402, %v514, %v510
        %v516 = vlaneseq
        %v517 = vshrl.u32 %v516, 7
        %v518 = vsub.s32 %v404, %v517
        %v519 = vrot.slane %v311, %v518
        %v520 = vsel %vm409, %v519, %v515
        %v521 = vlaneseq
        %v522 = vshrl.u32 %v521, 7
        %v523 = vsub.s32 %v411, %v522
        %v524 = vrot.slane %v314, %v523
        %v525 = vsel %vm416, %v524, %v520
        %v526 = vlaneseq
        %v527 = vshrl.u32 %v526, 7
        %v528 = vsub.s32 %v418, %v527
        %v529 = vrot.slane %v317, %v528
        %v530 = vsel %vm423, %v529, %v525
        %v531 = vlaneseq
        %v532 = vshrl.u32 %v531, 7
        %v533 = vsub.s32 %v425, %v532
        %v534 = vrot.slane %v320, %v533
        %v535 = vsel %vm430, %v534, %v530
        %v536 = vlaneseq
        %v537 = vshrl.u32 %v536, 7
        %v538 = vsub.s32 %v432, %v537
        %v539 = vrot.slane %v323, %v538
        %v540 = vsel %vm437, %v539, %v535
        %v541 = vlaneseq
        %v542 = vshrl.u32 %v541, 7
        %v543 = vsub.s32 %v439, %v542
        %v544 = vrot.slane %v326, %v543
        %v545 = vsel %vm444, %v544, %v540
        %v546 = vlaneseq
        %v547 = vshrl.u32 %v546, 7
        %v548 = vsub.s32 %v446, %v547
        %v549 = vrot.slane %v329, %v548
        %v550 = vsel %vm451, %v549, %v545
        %v551 = vlaneseq
        %v552 = vshrl.u32 %v551, 7
        %v553 = vsub.s32 %v453, %v552
        %v554 = vrot.slane %v332, %v553
        %v555 = vsel %vm458, %v554, %v550
        %vm557 = vcmask 1040384
        %v558 = vsel %vm557, %v459, %v555
        %v559 = vld [vmem:[%s1] sm:$0xff]
        %v560 = vld [vmem:[%s1 + $0x8] sm:$0xff]
        %v561 = vld [vmem:[%s1 + $0x10] sm:$0xff]
        %v562 = vld [vmem:[%s1 + $0x18] sm:$0xff]
        %v563 = vld [vmem:[%s1 + $0x20] sm:$0xff]
        %v564 = vld [vmem:[%s1 + $0x28] sm:$0xff]
        %v565 = vld [vmem:[%s1 + $0x30] sm:$0xff]
        %v566 = vld [vmem:[%s1 + $0x38] sm:$0xff]
        %v567 = vld [vmem:[%s1 + $0x40] sm:$0xff]
        %v568 = vld [vmem:[%s1 + $0x48] sm:$0xff]
        %v569 = vld [vmem:[%s1 + $0x50] sm:$0xff]
        %v570 = vld [vmem:[%s1 + $0x58] sm:$0xff]
        %v571 = vld [vmem:[%s1 + $0x60] sm:$0xff]
        %v572 = vld [vmem:[%s1 + $0x68] sm:$0xff]
        %v573 = vld [vmem:[%s1 + $0x70] sm:$0xff]
        %v574 = vld [vmem:[%s1 + $0x78] sm:$0xff]
        %v575 = vld [vmem:[%s2] sm:$0xff]
        %576 = vmatprep.subr.mxu0 0.0
        %577 = vmatpush1.msra.mxu0 %v559
        %578 = vmatprep.subr.mxu0 0.0
        %579 = vmatpush1.msra.mxu0 %v560
        %580 = vmatprep.subr.mxu0 0.0
        %581 = vmatpush1.msra.mxu0 %v561
        %582 = vmatprep.subr.mxu0 0.0
        %583 = vmatpush1.msra.mxu0 %v562
        %584 = vmatprep.subr.mxu0 0.0
        %585 = vmatpush1.msra.mxu0 %v563
        %586 = vmatprep.subr.mxu0 0.0
        %587 = vmatpush1.msra.mxu0 %v564
        %588 = vmatprep.subr.mxu0 0.0
        %589 = vmatpush1.msra.mxu0 %v565
        %590 = vmatprep.subr.mxu0 0.0
        %591 = vmatpush1.msra.mxu0 %v566
        %592 = vmatprep.subr.mxu0 0.0
        %593 = vmatpush1.msra.mxu0 %v567
        %594 = vmatprep.subr.mxu0 0.0
        %595 = vmatpush1.msra.mxu0 %v568
        %596 = vmatprep.subr.mxu0 0.0
        %597 = vmatpush1.msra.mxu0 %v569
        %598 = vmatprep.subr.mxu0 0.0
        %599 = vmatpush1.msra.mxu0 %v570
        %600 = vmatprep.subr.mxu0 0.0
        %601 = vmatpush1.msra.mxu0 %v571
        %602 = vmatprep.subr.mxu0 0.0
        %603 = vmatpush1.msra.mxu0 %v572
        %604 = vmatprep.subr.mxu0 0.0
        %605 = vmatpush1.msra.mxu0 %v573
        %606 = vmatprep.subr.mxu0 0.0
        %607 = vmatpush1.msra.mxu0 %v574
        %608 = vmatprep.subr.mxu0 0.0
        %609 = vmatpush1.msra.mxu0 0.0
        %610 = vmatprep.subr.mxu0 0.0
        %611 = vmatpush1.msra.mxu0 0.0
        %612 = vmatprep.subr.mxu0 0.0
        %613 = vmatpush1.msra.mxu0 0.0
        %614 = vmatprep.subr.mxu0 0.0
        %615 = vmatpush1.msra.mxu0 0.0
        %616 = vmatprep.subr.mxu0 0.0
        %617 = vmatpush1.msra.mxu0 0.0
        %618 = vmatprep.subr.mxu0 0.0
        %619 = vmatpush1.msra.mxu0 0.0
        %620 = vmatprep.subr.mxu0 0.0
        %621 = vmatpush1.msra.mxu0 0.0
        %622 = vmatprep.subr.mxu0 0.0
        %623 = vmatpush1.msra.mxu0 0.0
        %624 = vmatprep.subr.mxu0 0.0
        %625 = vmatpush1.msra.mxu0 0.0
        %626 = vmatprep.subr.mxu0 0.0
        %627 = vmatpush1.msra.mxu0 0.0
        %628 = vmatprep.subr.mxu0 0.0
        %629 = vmatpush1.msra.mxu0 0.0
        %630 = vmatprep.subr.mxu0 0.0
        %631 = vmatpush1.msra.mxu0 0.0
        %632 = vmatprep.subr.mxu0 0.0
        %633 = vmatpush1.msra.mxu0 0.0
        %634 = vmatprep.subr.mxu0 0.0
        %635 = vmatpush1.msra.mxu0 0.0
        %636 = vmatprep.subr.mxu0 0.0
        %637 = vmatpush1.msra.mxu0 0.0
        %638 = vmatprep.subr.mxu0 0.0
        %639 = vmatpush1.msra.mxu0 0.0
        %640 = vmatprep.mubr.f32.mxu0 0.0
        %641 = vmatmul.mubr.f32.gmra.mrb[0].mxu0 %v558
        %v642 = vpop.f32.mrb[0].mxu0
        %v643 = vadd.f32 0.0, %v642
        %v644 = vpop.f32.mrb[0].mxu0
        %645 = vdwg.mxu0
        %v646 = vmax.f32 %v643, 0.0
        %v648 = vrot.slane %v646, 1
        %v650 = vadd.f32 %v646, %v648
        %vm651 = vcmask 64512
        %v653 = vsel %vm651, %v650, 0
        %655 = vmatprep.subr.mxu0 0.0
        %656 = vmatpush1.msra.mxu0 %v575
        %657 = vmatprep.subr.mxu0 0.0
        %658 = vmatpush1.msra.mxu0 0.0
        %659 = vmatprep.subr.mxu0 0.0
        %660 = vmatpush1.msra.mxu0 0.0
        %661 = vmatprep.subr.mxu0 0.0
        %662 = vmatpush1.msra.mxu0 0.0
        %663 = vmatprep.subr.mxu0 0.0
        %664 = vmatpush1.msra.mxu0 0.0
        %665 = vmatprep.subr.mxu0 0.0
        %666 = vmatpush1.msra.mxu0 0.0
        %667 = vmatprep.subr.mxu0 0.0
        %668 = vmatpush1.msra.mxu0 0.0
        %669 = vmatprep.subr.mxu0 0.0
        %670 = vmatpush1.msra.mxu0 0.0
        %671 = vmatprep.subr.mxu0 0.0
        %672 = vmatpush1.msra.mxu0 0.0
        %673 = vmatprep.subr.mxu0 0.0
        %674 = vmatpush1.msra.mxu0 0.0
        %675 = vmatprep.subr.mxu0 0.0
        %676 = vmatpush1.msra.mxu0 0.0
        %677 = vmatprep.subr.mxu0 0.0
        %678 = vmatpush1.msra.mxu0 0.0
        %679 = vmatprep.subr.mxu0 0.0
        %680 = vmatpush1.msra.mxu0 0.0
        %681 = vmatprep.subr.mxu0 0.0
        %682 = vmatpush1.msra.mxu0 0.0
        %683 = vmatprep.subr.mxu0 0.0
        %684 = vmatpush1.msra.mxu0 0.0
        %685 = vmatprep.subr.mxu0 0.0
        %686 = vmatpush1.msra.mxu0 0.0
        %687 = vmatprep.subr.mxu0 0.0
        %688 = vmatpush1.msra.mxu0 0.0
        %689 = vmatprep.subr.mxu0 0.0
        %690 = vmatpush1.msra.mxu0 0.0
        %691 = vmatprep.subr.mxu0 0.0
        %692 = vmatpush1.msra.mxu0 0.0
        %693 = vmatprep.subr.mxu0 0.0
        %694 = vmatpush1.msra.mxu0 0.0
        %695 = vmatprep.subr.mxu0 0.0
        %696 = vmatpush1.msra.mxu0 0.0
        %697 = vmatprep.subr.mxu0 0.0
        %698 = vmatpush1.msra.mxu0 0.0
        %699 = vmatprep.subr.mxu0 0.0
        %700 = vmatpush1.msra.mxu0 0.0
        %701 = vmatprep.subr.mxu0 0.0
        %702 = vmatpush1.msra.mxu0 0.0
        %703 = vmatprep.subr.mxu0 0.0
        %704 = vmatpush1.msra.mxu0 0.0
        %705 = vmatprep.subr.mxu0 0.0
        %706 = vmatpush1.msra.mxu0 0.0
        %707 = vmatprep.subr.mxu0 0.0
        %708 = vmatpush1.msra.mxu0 0.0
        %709 = vmatprep.subr.mxu0 0.0
        %710 = vmatpush1.msra.mxu0 0.0
        %711 = vmatprep.subr.mxu0 0.0
        %712 = vmatpush1.msra.mxu0 0.0
        %713 = vmatprep.subr.mxu0 0.0
        %714 = vmatpush1.msra.mxu0 0.0
        %715 = vmatprep.subr.mxu0 0.0
        %716 = vmatpush1.msra.mxu0 0.0
        %717 = vmatprep.subr.mxu0 0.0
        %718 = vmatpush1.msra.mxu0 0.0
        %719 = vmatprep.mubr.f32.mxu0 0.0
        %720 = vmatmul.mubr.f32.gmra.mrb[0].mxu0 %v653
        %v721 = vpop.f32.mrb[0].mxu0
        %v722 = vadd.f32 0.0, %v721
        %v723 = vpop.f32.mrb[0].mxu0
        %724 = vdwg.mxu0
        %v725 = vxor.u32 %v722, 2147483648
        %v726 = vmul.f32 %v725, 1.442695
        %v727 = vpow.pop %v726
        %v728 = vadd.f32 %v727, 1.0
        %v729 = vrcp.pop %v728
        %v730 = vmul.f32 1.0, %v729
        %v731 = vlaneseq
        %v732 = vshrl.u32 %v731, 7
        %v733 = vsub.s32 0, %v732
        %v734 = vrot.slane %v730, %v733
        %736 = vbcast.lane.b32.xlu0 %v734, 256
        %v737 = vpop.permute.xlu0 %736
        %s739 = sor.u32 256, 8
        %740 = vbcast.lane.b32.xlu0 %v734, %s739
        %v741 = vpop.permute.xlu0 %740
        %s743 = sor.u32 256, 16
        %744 = vbcast.lane.b32.xlu0 %v734, %s743
        %v745 = vpop.permute.xlu0 %744
        %s747 = sor.u32 256, 24
        %748 = vbcast.lane.b32.xlu0 %v734, %s747
        %v749 = vpop.permute.xlu0 %748
        %s751 = sor.u32 256, 32
        %752 = vbcast.lane.b32.xlu0 %v734, %s751
        %v753 = vpop.permute.xlu0 %752
        %s755 = sor.u32 256, 40
        %756 = vbcast.lane.b32.xlu0 %v734, %s755
        %v757 = vpop.permute.xlu0 %756
        %s759 = sor.u32 256, 48
        %760 = vbcast.lane.b32.xlu0 %v734, %s759
        %v761 = vpop.permute.xlu0 %760
        %s763 = sor.u32 256, 56
        %764 = vbcast.lane.b32.xlu0 %v734, %s763
        %v765 = vpop.permute.xlu0 %764
        %s767 = sor.u32 256, 64
        %768 = vbcast.lane.b32.xlu0 %v734, %s767
        %v769 = vpop.permute.xlu0 %768
        %s771 = sor.u32 256, 72
        %772 = vbcast.lane.b32.xlu0 %v734, %s771
        %v773 = vpop.permute.xlu0 %772
        %s775 = sor.u32 256, 80
        %776 = vbcast.lane.b32.xlu0 %v734, %s775
        %v777 = vpop.permute.xlu0 %776
        %s779 = sor.u32 256, 88
        %780 = vbcast.lane.b32.xlu0 %v734, %s779
        %v781 = vpop.permute.xlu0 %780
        %s783 = sor.u32 256, 96
        %784 = vbcast.lane.b32.xlu0 %v734, %s783
        %v785 = vpop.permute.xlu0 %784
        %s787 = sor.u32 256, 104
        %788 = vbcast.lane.b32.xlu0 %v734, %s787
        %v789 = vpop.permute.xlu0 %788
        %s791 = sor.u32 256, 112
        %792 = vbcast.lane.b32.xlu0 %v734, %s791
        %v793 = vpop.permute.xlu0 %792
        %s795 = sor.u32 256, 120
        %796 = vbcast.lane.b32.xlu0 %v734, %s795
        %v797 = vpop.permute.xlu0 %796
        %v798 = vmul.f32 %v189, %v737
        %v799 = vmul.f32 %v190, %v737
        %v800 = vmul.f32 %v191, %v741
        %v801 = vmul.f32 %v192, %v741
        %v802 = vmul.f32 %v193, %v745
        %v803 = vmul.f32 %v194, %v745
        %v804 = vmul.f32 %v195, %v749
        %v805 = vmul.f32 %v196, %v749
        %v806 = vmul.f32 %v197, %v753
        %v807 = vmul.f32 %v198, %v753
        %v808 = vmul.f32 %v199, %v757
        %v809 = vmul.f32 %v200, %v757
        %v810 = vmul.f32 %v201, %v761
        %v811 = vmul.f32 %v202, %v761
        %v812 = vmul.f32 %v203, %v765
        %v813 = vmul.f32 %v204, %v765
        %v814 = vmul.f32 %v205, %v769
        %v815 = vmul.f32 %v206, %v769
        %v816 = vmul.f32 %v207, %v773
        %v817 = vmul.f32 %v208, %v773
        %v818 = vmul.f32 %v209, %v777
        %v819 = vmul.f32 %v210, %v777
        %v820 = vmul.f32 %v211, %v781
        %v821 = vmul.f32 %v212, %v781
        %v822 = vmul.f32 %v213, %v785
        %v823 = vmul.f32 %v214, %v785
        %v824 = vmul.f32 %v215, %v789
        %v825 = vmul.f32 %v216, %v789
        %v826 = vmul.f32 %v217, %v793
        %v827 = vmul.f32 %v218, %v793
        %v828 = vmul.f32 %v219, %v797
        %v829 = vmul.f32 %v220, %v797
        %830 = vst [vmem:[%s188] sm:$0xff] %v798
        %831 = vst [vmem:[%s188 + $0x8] sm:$0xff] %v799
        %832 = vst [vmem:[%s188 + $0x10] sm:$0xff] %v800
        %833 = vst [vmem:[%s188 + $0x18] sm:$0xff] %v801
        %834 = vst [vmem:[%s188 + $0x20] sm:$0xff] %v802
        %835 = vst [vmem:[%s188 + $0x28] sm:$0xff] %v803
        %836 = vst [vmem:[%s188 + $0x30] sm:$0xff] %v804
        %837 = vst [vmem:[%s188 + $0x38] sm:$0xff] %v805
        %838 = vst [vmem:[%s188 + $0x40] sm:$0xff] %v806
        %839 = vst [vmem:[%s188 + $0x48] sm:$0xff] %v807
        %840 = vst [vmem:[%s188 + $0x50] sm:$0xff] %v808
        %841 = vst [vmem:[%s188 + $0x58] sm:$0xff] %v809
        %842 = vst [vmem:[%s188 + $0x60] sm:$0xff] %v810
        %843 = vst [vmem:[%s188 + $0x68] sm:$0xff] %v811
        %844 = vst [vmem:[%s188 + $0x70] sm:$0xff] %v812
        %845 = vst [vmem:[%s188 + $0x78] sm:$0xff] %v813
        %846 = vst [vmem:[%s188 + $0x80] sm:$0xff] %v814
        %847 = vst [vmem:[%s188 + $0x88] sm:$0xff] %v815
        %848 = vst [vmem:[%s188 + $0x90] sm:$0xff] %v816
        %849 = vst [vmem:[%s188 + $0x98] sm:$0xff] %v817
        %850 = vst [vmem:[%s188 + $0xa0] sm:$0xff] %v818
        %851 = vst [vmem:[%s188 + $0xa8] sm:$0xff] %v819
        %852 = vst [vmem:[%s188 + $0xb0] sm:$0xff] %v820
        %853 = vst [vmem:[%s188 + $0xb8] sm:$0xff] %v821
        %854 = vst [vmem:[%s188 + $0xc0] sm:$0xff] %v822
        %855 = vst [vmem:[%s188 + $0xc8] sm:$0xff] %v823
        %856 = vst [vmem:[%s188 + $0xd0] sm:$0xff] %v824
        %857 = vst [vmem:[%s188 + $0xd8] sm:$0xff] %v825
        %858 = vst [vmem:[%s188 + $0xe0] sm:$0xff] %v826
        %859 = vst [vmem:[%s188 + $0xe8] sm:$0xff] %v827
        %860 = vst [vmem:[%s188 + $0xf0] sm:$0xff] %v828
        %861 = vst [vmem:[%s188 + $0xf8] sm:$0xff] %v829
        %s862 = sand.u32 %s96, 1
        %s863 = scalar_lea.sflag [#allocation4], %s862
        %s864 = sand.u32 %s96, 1
        %s865 = smul.addr %s864, 256
        %s866 = scalar_lea.vmem [#allocation5], %s865
        // Predicated region
        $region37: #{tpu_custom_call.1} parent=31 // pred_check
          %p867 = pneg %p106
        $region38: #{tpu_custom_call.1} parent=31 // pred_check_branch
          %869 = sbr.rel (%p867) target = $region40
        $region39: #{tpu_custom_call.1} parent=31 // pred_region
          %s871 = ssub.s32 4096, 4096
          %872 = vsyncadd %s863, %s871
          %s873 = smul.addr %s20, 32
          %s874 = smul.addr %s873, 128
          %s875 = scalar_lea.hbm %s3, %s874
          %s876 = sshll.u32 %s866, 4
          %s877 = int_to_ptr.vmem [resolvable:$true] %s876
          %882 = dma.vmem_to_hbm [thread:$0]  %s877, 4096, %s875, %s863, 256, 256, 16
        $region40: #{tpu_custom_call.1} parent=31 // pred_fallthru
          _
      $region32: #{tpu_custom_call.1} parent=5 // pred_fallthru
        _
      %p883 = scmp.le.s32.totalorder 2, %s15
      // Predicated region
      $region41: #{tpu_custom_call.1} parent=5 // pred_check
        %p884 = pneg %p883
      $region42: #{tpu_custom_call.1} parent=5 // pred_check_branch
        %886 = sbr.rel (%p884) target = $region44
      $region43: #{tpu_custom_call.1} parent=5 // pred_region
        %s887 = ssub.s32 %s15, 2
        // Predicated region
        $region45: #{tpu_custom_call.1} parent=43 // pred_check
          %p888 = pneg %p112
        $region46: #{tpu_custom_call.1} parent=43 // pred_check_branch
          %890 = sbr.rel (%p888) target = $region48
        $region47: #{tpu_custom_call.1} parent=43 // pred_region
          %s891 = sand.u32 %s97, 1
          %s892 = scalar_lea.sflag [#allocation4], %s891
          %s893 = sand.u32 %s97, 1
          %s894 = smul.addr %s893, 256
          %s895 = scalar_lea.vmem [#allocation5], %s894
          %896 = dma.done %s892, 4096
        $region48: #{tpu_custom_call.1} parent=43 // pred_fallthru
          _
      $region44: #{tpu_custom_call.1} parent=5 // pred_fallthru
        _
    $region6: #{tpu_custom_call.1} parent=1 // loop_footer
      %s19 = sadd.s32 1, %s15
    $region7: #{tpu_custom_call.1} parent=1 // loop_footer_branch
      %14 = sbr.rel target = $region3
    $region8: #{tpu_custom_call.1} parent=1 // loop_exit
      _
    %897 = vsyncpa [#allocation3], 1
    %s898 = scalar_lea.sflag [#allocation3], 1
    %899 = vsyncpa %s898, 1
    %900 = vsyncpa [#allocation4], 1
    %s901 = scalar_lea.sflag [#allocation4], 1
    %902 = vsyncpa %s901, 1

</llo_original>
